<compile_context>
chip_gen: v7x
topology: tpu7x:2x2x1
jax: 0.10.0
libtpu: 0.0.40
codegen_flags: <defaults>
</compile_context>

<pallas_src>
import functools

import jax
import jax.numpy as jnp
import numpy as np
from jax.experimental import pallas as pl
from jax.experimental.pallas import tpu as pltpu


def _round_up(x, m):
    return ((x + m - 1) // m) * m


def _sublane(dtype):
    # Native sublane tile: 8 rows for 32-bit, 16 for bf16, 32 for 8-bit types.
    return max(8, 32 // jnp.dtype(dtype).itemsize)


def _vmem_capacity_bytes():
    try:
        info = pltpu.get_tpu_info()
        cap = getattr(info, "vmem_capacity_bytes", None)
        if cap:
            return int(cap)
    except Exception:
        pass
    return 64 * 2 ** 20  # conservative fallback: v7x per-TensorCore VMEM


def _transpose_conv1d_kernel(tT, E, K, use_im2col, compute_dtype,
                             x_ref, xe_ref, w_ref, b_ref, o_ref, xc_ref):
    # x_ref : (1, tT, C_in)    main time tile (channels-last, zero padded)
    # xe_ref: (1, E, C_in)     halo rows immediately following the tile
    # w_ref : (K, C_in, C_out) per-tap weights [or (K*C_in, C_out) im2col]
    # b_ref : (1, C_out)       float32 bias
    # o_ref : (1, tT, C_out)
    # xc_ref: (tT+E, C_in)     persistent staging scratch (replaces the old
    #                          per-step functional concatenate)
    xc_ref[pl.ds(0, tT), :] = x_ref[0]
    xc_ref[pl.ds(tT, E), :] = xe_ref[0]
    xc = xc_ref[...]                                  # (tT+E, C_in), x dtype
    rows = tT + E

    def window(k, dtype):
        # Tap k needs rows [k, k+tT): XLU roll + offset-0 slice keeps every
        # vector load sublane-aligned (no unaligned/masked loads).
        w = xc if k == 0 else pltpu.roll(xc, shift=rows - k, axis=0)
        return w[:tT, :].astype(dtype)

    if use_im2col:
        # Small-channel path: taps stacked on the contraction dim, one matmul.
        x_blk = (window(0, xc.dtype) if K == 1 else
                 jnp.concatenate([window(k, xc.dtype) for k in range(K)],
                                 axis=-1))            # (tT, K*C_in)
        acc = jnp.dot(x_blk.astype(compute_dtype), w_ref[...],
                      preferred_element_type=jnp.float32)
    else:
        # Production path: per-tap accumulating matmuls; only one (tT, C_in)
        # tap (cast once, right before the MXU) is live at a time.
        acc = jnp.dot(window(0, compute_dtype), w_ref[0],
                      preferred_element_type=jnp.float32)
        for k in range(1, K):
            acc = acc + jnp.dot(window(k, compute_dtype), w_ref[k],
                                preferred_element_type=jnp.float32)

    o_ref[0] = (acc + b_ref[...].astype(jnp.float32)).astype(o_ref.dtype)


def transpose_conv1d(x, weight, bias, *, time_tile=512,
                     compute_dtype=jnp.bfloat16):
    """Transpose(nn.Conv1d)(x) with x in (B, T, C_in) -> (B, T, C_out).

    weight: (C_out, C_in, K) — PyTorch Conv1d layout.  bias: (C_out,).
    compute_dtype: MXU operand dtype (default bf16, the native MXU format on
    v5e/v6e/v7x; pass jnp.float32 or None for exact f32).  Accumulation is
    always float32 and the output keeps x.dtype.
    """
    B, T, C_in = x.shape
    C_out, C_in_w, K = weight.shape
    assert C_in_w == C_in
    assert K % 2 == 1, "PyTorch 'same' Conv1d with padding=(K-1)//2 needs odd K"
    pad = (K - 1) // 2
    cd = jnp.dtype(x.dtype) if compute_dtype is None else jnp.dtype(compute_dtype)
    use_im2col = C_in < 128        # per-tap accumulation once C_in fills the MXU

    # --- time tiling (sublane-aligned, VMEM-budgeted) -----------------------
    sub = _sublane(x.dtype)                       # sublane tile of streamed data
    E = max(sub, _round_up(K - 1, sub))           # halo rows
    tT = _round_up(min(time_tile, _round_up(T, sub)), E)

    x_sz, cd_sz, o_sz = x.dtype.itemsize, cd.itemsize, x.dtype.itemsize

    def footprint(t):
        stream = 2 * ((t + E) * C_in * x_sz + t * C_out * o_sz)    # dbl-buffered
        consts = 2 * (K * C_in * C_out * cd_sz + C_out * 4)        # w + b
        scratch = (t + E) * C_in * x_sz
        temps = (t + E) * C_in * x_sz + t * C_in * cd_sz + 2 * t * C_out * 4
        if use_im2col:
            temps += t * K * C_in * cd_sz
        return stream + consts + scratch + temps

    vmem_cap = _vmem_capacity_bytes()             # 64 MiB v7x, 128 MiB v5e/v6e
    budget = int(0.45 * vmem_cap)
    while tT > E and footprint(tT) > budget:
        tT -= E
    nT = pl.cdiv(T, tT)
    T_grid = nT * tT
    L = T_grid + E                                # padded time length

    # --- operand layouts ----------------------------------------------------
    # TODO(synk): eliminate this full-copy pad by masking edge halo rows in-kernel.
    x_pad = jnp.pad(x, ((0, 0), (pad, L - pad - T), (0, 0)))

    if use_im2col:
        # (C_out, C_in, K) -> (K*C_in, C_out): taps stacked on contraction.
        w_mat = jnp.transpose(weight, (2, 1, 0)).reshape(K * C_in, C_out)
        w_spec = pl.BlockSpec((K * C_in, C_out), lambda b, i: (0, 0))
    else:
        # (C_out, C_in, K) -> (K, C_in, C_out): one (C_in, C_out) slab per tap.
        w_mat = jnp.transpose(weight, (2, 1, 0))
        w_spec = pl.BlockSpec((K, C_in, C_out), lambda b, i: (0, 0, 0))
    w_mat = w_mat.astype(cd)
    b_mat = bias.reshape(1, C_out).astype(jnp.float32)

    kernel = functools.partial(_transpose_conv1d_kernel, tT, E, K, use_im2col, cd)

    vmem_limit = int(min(int(0.85 * vmem_cap),
                         max(16 * 2 ** 20, int(1.3 * footprint(tT)))))

    cost = pl.CostEstimate(
        flops=2 * B * T_grid * K * C_in * C_out,
        transcendentals=0,
        bytes_accessed=(x_pad.size * x_sz + w_mat.size * cd_sz
                        + b_mat.size * 4 + B * T_grid * C_out * o_sz))

    out = pl.pallas_call(
        kernel,
        out_shape=jax.ShapeDtypeStruct((B, T_grid, C_out), x.dtype),
        grid_spec=pltpu.PrefetchScalarGridSpec(
            num_scalar_prefetch=0,
            grid=(B, nT),
            in_specs=[
                # main tile: rows [i*tT, (i+1)*tT)
                pl.BlockSpec((1, tT, C_in), lambda b, i: (b, i, 0)),
                # halo: E rows starting at the next tile boundary (tT % E == 0)
                pl.BlockSpec((1, E, C_in),
                             lambda b, i: (b, (i + 1) * (tT // E), 0)),
                w_spec,
                pl.BlockSpec((1, C_out), lambda b, i: (0, 0)),
            ],
            out_specs=pl.BlockSpec((1, tT, C_out), lambda b, i: (b, i, 0)),
            scratch_shapes=[pltpu.VMEM((tT + E, C_in), x.dtype)],
        ),
        compiler_params=pltpu.CompilerParams(
            dimension_semantics=("parallel", "parallel"),
            vmem_limit_bytes=vmem_limit),
        cost_estimate=cost,
    )(x_pad, x_pad, w_mat, b_mat)

    return out[:, :T, :] if T_grid != T else out


def _reference(x, weight, bias):
    # Pure-JAX reference: literal transpose -> Conv1d (NCW) -> transpose.
    pad = (weight.shape[-1] - 1) // 2
    x_ncw = jnp.transpose(x, (0, 2, 1))                     # (B, C_in, T)
    out = jax.lax.conv_general_dilated(
        x_ncw, weight, window_strides=(1,), padding=((pad, pad),),
        dimension_numbers=("NCH", "OIH", "NCH"))
    out = out + bias[None, :, None]
    return jnp.transpose(out, (0, 2, 1))                    # (B, T, C_out)


if __name__ == "__main__":
    def make_case(key, B, T, C_in, C_out, K):
        kx, kw, kb = jax.random.split(key, 3)
        bound = 1.0 / np.sqrt(C_in * K)
        x = jax.random.normal(kx, (B, T, C_in), dtype=jnp.float32)
        w = jax.random.uniform(kw, (C_out, C_in, K), jnp.float32,
                               minval=-bound, maxval=bound)
        b = jax.random.uniform(kb, (C_out,), jnp.float32,
                               minval=-bound, maxval=bound)
        return x, w, b

    keys = jax.random.split(jax.random.PRNGKey(0), 5)

    # 1) Small FastSpeech2-like shape, im2col path, exact f32 operands.
    x, w, b = make_case(keys[0], 2, 16, 32, 32, 3)
    out = jax.block_until_ready(
        transpose_conv1d(x, w, b, compute_dtype=jnp.float32))
    ref = _reference(x, w, b)
    assert out.shape == ref.shape
    np.testing.assert_allclose(np.asarray(out), np.asarray(ref),
                               rtol=1e-5, atol=1e-5)

    # 2) Multi-tile time axis (halo blocks exercised), T not a tile multiple.
    x, w, b = make_case(keys[1], 2, 200, 32, 48, 3)
    out = jax.block_until_ready(
        transpose_conv1d(x, w, b, time_tile=64, compute_dtype=jnp.float32))
    ref = _reference(x, w, b)
    np.testing.assert_allclose(np.asarray(out), np.asarray(ref),
                               rtol=1e-5, atol=1e-5)

    # 3) Default bf16 MXU operands (im2col path), f32 accumulation.
    x, w, b = make_case(keys[2], 2, 64, 32, 32, 3)
    out = jax.block_until_ready(transpose_conv1d(x, w, b, time_tile=64))
    ref = _reference(x, w, b)
    np.testing.assert_allclose(np.asarray(out), np.asarray(ref),
                               rtol=3e-2, atol=3e-2)

    # 4) Per-tap accumulation path (C_in >= 128), exact f32 operands.
    x, w, b = make_case(keys[3], 2, 64, 128, 128, 3)
    out = jax.block_until_ready(
        transpose_conv1d(x, w, b, time_tile=64, compute_dtype=jnp.float32))
    ref = _reference(x, w, b)
    np.testing.assert_allclose(np.asarray(out), np.asarray(ref),
                               rtol=1e-4, atol=1e-4)

    # 5) Per-tap path, default bf16, wider kernel (K=5 halo).
    x, w, b = make_case(keys[4], 1, 48, 128, 256, 5)
    out = jax.block_until_ready(transpose_conv1d(x, w, b, time_tile=48))
    ref = _reference(x, w, b)
    np.testing.assert_allclose(np.asarray(out), np.asarray(ref),
                               rtol=5e-2, atol=5e-2)

    print("KERNEL_OK")
</pallas_src>

<mosaic_0001>
module attributes {stable_mosaic.version = 11 : i64} {
  func.func @_transpose_conv1d_kernel(%arg0: i32, %arg1: i32, %arg2: memref<1x16x32xf32, #tpu.memory_space<vmem>>, %arg3: memref<1x8x32xf32, #tpu.memory_space<vmem>>, %arg4: memref<96x32xf32, #tpu.memory_space<vmem>>, %arg5: memref<1x32xf32, #tpu.memory_space<vmem>>, %arg6: memref<1x16x32xf32, #tpu.memory_space<vmem>>, %arg7: memref<24x32xf32, #tpu.memory_space<vmem>>) attributes {dimension_semantics = [#tpu.dimension_semantics<parallel>, #tpu.dimension_semantics<parallel>], iteration_bounds = array<i64: 2, 1>, scalar_prefetch = 0 : i64, scratch_operands = 1 : i64, tpu.core_type = #tpu.core_type<tc>, window_params = [{transform_indices = @transform_0, window_bounds = array<i64: 1, 16, 32>}, {transform_indices = @transform_1, window_bounds = array<i64: 1, 8, 32>}, {pipeline_mode = #tpu.pipeline_mode<synchronous>, transform_indices = @transform_2, window_bounds = array<i64: 96, 32>}, {pipeline_mode = #tpu.pipeline_mode<synchronous>, transform_indices = @transform_3, window_bounds = array<i64: 1, 32>}, {transform_indices = @transform_4, window_bounds = array<i64: 1, 16, 32>}]} {
    %c0 = arith.constant 0 : index
    %c0_0 = arith.constant 0 : index
    %c0_1 = arith.constant 0 : index
    %0 = vector.load %arg2[%c0, %c0_0, %c0_1] : memref<1x16x32xf32, #tpu.memory_space<vmem>>, vector<1x16x32xf32>
    %1 = vector.shape_cast %0 : vector<1x16x32xf32> to vector<16x32xf32>
    %c0_2 = arith.constant 0 : index
    %c0_3 = arith.constant 0 : index
    %2 = vector.load %arg7[%c0_2, %c0_3] : memref<24x32xf32, #tpu.memory_space<vmem>>, vector<16x32xf32>
    tpu.vector_store %arg7[%c0_2, %c0_3], %1 {strides = array<i32>} : memref<24x32xf32, #tpu.memory_space<vmem>>, vector<16x32xf32>,
    %c0_4 = arith.constant 0 : index
    %c0_5 = arith.constant 0 : index
    %c0_6 = arith.constant 0 : index
    %3 = vector.load %arg3[%c0_4, %c0_5, %c0_6] : memref<1x8x32xf32, #tpu.memory_space<vmem>>, vector<1x8x32xf32>
    %4 = vector.shape_cast %3 : vector<1x8x32xf32> to vector<8x32xf32>
    %c16 = arith.constant 16 : index
    %c0_7 = arith.constant 0 : index
    %5 = vector.load %arg7[%c16, %c0_7] : memref<24x32xf32, #tpu.memory_space<vmem>>, vector<8x32xf32>
    tpu.vector_store %arg7[%c16, %c0_7], %4 {strides = array<i32>} : memref<24x32xf32, #tpu.memory_space<vmem>>, vector<8x32xf32>,
    %c0_8 = arith.constant 0 : index
    %c0_9 = arith.constant 0 : index
    %6 = vector.load %arg7[%c0_8, %c0_9] : memref<24x32xf32, #tpu.memory_space<vmem>>, vector<24x32xf32>
    %7 = vector.extract_strided_slice %6 {offsets = [0, 0], sizes = [16, 32], strides = [1, 1]} : vector<24x32xf32> to vector<16x32xf32>
    %c23_i32 = arith.constant 23 : i32
    %8 = tpu.dynamic_rotate %6 by %c23_i32 dim 0 : vector<24x32xf32>, i32 -> vector<24x32xf32>
    %9 = vector.extract_strided_slice %8 {offsets = [0, 0], sizes = [16, 32], strides = [1, 1]} : vector<24x32xf32> to vector<16x32xf32>
    %c22_i32 = arith.constant 22 : i32
    %10 = tpu.dynamic_rotate %6 by %c22_i32 dim 0 : vector<24x32xf32>, i32 -> vector<24x32xf32>
    %11 = vector.extract_strided_slice %10 {offsets = [0, 0], sizes = [16, 32], strides = [1, 1]} : vector<24x32xf32> to vector<16x32xf32>
    %12 = tpu.concatenate %7, %9, %11 in 1 : vector<16x32xf32>, vector<16x32xf32>, vector<16x32xf32> -> vector<16x96xf32>
    %c0_10 = arith.constant 0 : index
    %c0_11 = arith.constant 0 : index
    %13 = vector.load %arg4[%c0_10, %c0_11] : memref<96x32xf32, #tpu.memory_space<vmem>>, vector<96x32xf32>
    %cst = arith.constant dense<0.000000e+00> : vector<16x32xf32>
    %14 = tpu.matmul %12, %13, %cst {dimension_numbers = #tpu.dot_dimension_numbers<[1], [0], [0], [1], [0, 0, 1, 1], [], []>} : vector<16x96xf32>, vector<96x32xf32>, vector<16x32xf32> -> vector<16x32xf32>
    %c0_12 = arith.constant 0 : index
    %c0_13 = arith.constant 0 : index
    %15 = vector.load %arg5[%c0_12, %c0_13] : memref<1x32xf32, #tpu.memory_space<vmem>>, vector<1x32xf32>
    %16 = vector.broadcast %15 : vector<1x32xf32> to vector<16x32xf32>
    %17 = arith.addf %14, %16 : vector<16x32xf32>
    %c0_14 = arith.constant 0 : index
    %c0_15 = arith.constant 0 : index
    %c0_16 = arith.constant 0 : index
    %18 = vector.load %arg6[%c0_14, %c0_15, %c0_16] : memref<1x16x32xf32, #tpu.memory_space<vmem>>, vector<1x16x32xf32>
    %19 = vector.shape_cast %18 : vector<1x16x32xf32> to vector<16x32xf32>
    %20 = vector.shape_cast %17 : vector<16x32xf32> to vector<1x16x32xf32>
    tpu.vector_store %arg6[%c0_14, %c0_15, %c0_16], %20 {strides = array<i32>} : memref<1x16x32xf32, #tpu.memory_space<vmem>>, vector<1x16x32xf32>,
    return
  }
  func.func @transform_0(%arg0: i32, %arg1: i32) -> (i32, i32, i32) {
    %c0_i32 = arith.constant 0 : i32
    %c0_i32_0 = arith.constant 0 : i32
    return %arg0, %arg1, %c0_i32 : i32, i32, i32
  }
  func.func @transform_1(%arg0: i32, %arg1: i32) -> (i32, i32, i32) {
    %c1_i32 = arith.constant 1 : i32
    %0 = arith.addi %arg1, %c1_i32 : i32
    %c2_i32 = arith.constant 2 : i32
    %1 = arith.muli %0, %c2_i32 : i32
    %c0_i32 = arith.constant 0 : i32
    %c0_i32_0 = arith.constant 0 : i32
    return %arg0, %1, %c0_i32 : i32, i32, i32
  }
  func.func @transform_2(%arg0: i32, %arg1: i32) -> (i32, i32) {
    %c0_i32 = arith.constant 0 : i32
    %c0_i32_0 = arith.constant 0 : i32
    %c0_i32_1 = arith.constant 0 : i32
    return %c0_i32, %c0_i32_0 : i32, i32
  }
  func.func @transform_3(%arg0: i32, %arg1: i32) -> (i32, i32) {
    %c0_i32 = arith.constant 0 : i32
    %c0_i32_0 = arith.constant 0 : i32
    %c0_i32_1 = arith.constant 0 : i32
    return %c0_i32, %c0_i32_0 : i32, i32
  }
  func.func @transform_4(%arg0: i32, %arg1: i32) -> (i32, i32, i32) {
    %c0_i32 = arith.constant 0 : i32
    %c0_i32_0 = arith.constant 0 : i32
    return %arg0, %arg1, %c0_i32 : i32, i32, i32
  }
}

</mosaic_0001>

<llo_original>
// kernel: tpu_custom_call.1
$region0: #{tpu_custom_call.1}
  #allocation0 [shape = 'u32[]', space=smem, size = 0x4, offset = 0x4, fixed_abs, tag = 'smem constant byte address 0x4 - core index']
  #allocation1 [shape = 'u32[144,128]{1,0:T(1,128)}', space=vmem, size = 0x12000, scoped, tag = 'internal scratch']
  #allocation2 [shape = 'f32[24,32]{1,0:T(8,128)}', space=vmem, size = 0x3000, scoped, tag = 'scratch operand']
  %s0 = inlined_call_operand.vmem [shape: f32[2,24,32], index: 0, kind: input, shape index: {}]
  %s1 = inlined_call_operand.vmem [shape: f32[2,24,32], index: 1, kind: input, shape index: {}]
  %s2 = inlined_call_operand.vmem [shape: f32[96,32], index: 2, kind: input, shape index: {}]
  %s3 = inlined_call_operand.vmem [shape: f32[1,32], index: 3, kind: input, shape index: {}]
  %s4 = inlined_call_operand.hbm [shape: f32[2,16,32], index: 4, kind: output, shape index: {}]
  %s5 = sld [smem:[#allocation0]]
  $region49: #{tpu_custom_call.1} parent=0
    _
  %s7 = ssub.s32 1, %s5
  %s8 = scalar_select 0, %s7, %s5
  $region1: #{tpu_custom_call.1} parent=0
    #allocation3 [shape = 'u8[16384]{0}', space=vmem, size = 0x4000, scoped, tag = 'output window, operand 0']
    #allocation4 [shape = 's32[2]{0}', space=sflag, size = 0x8, scoped, tag = 'scoped memory for tpu_custom_call.1']
    %9 = vsyncpa [#allocation4], 0
    %s10 = scalar_lea.sflag [#allocation4], 1
    %11 = vsyncpa %s10, 0
    loop: start=0, step=1, limit=4
    $region2: #{tpu_custom_call.1} parent=1 // loop_pre_header
      _
    $region3: #{tpu_custom_call.1} parent=1 // loop_header
      %s13 = sphi 0, %s17
      %p14 = scmp.ge.s32.totalorder %s13, 4
      %s20 = sphi 0, %s32
      %s21 = sphi 0, %s28
      %s22 = sphi 0, %s20
      %s23 = sphi 0, %s21
      %s24 = sphi 0, %s22
      %s25 = sphi 0, %s23
      %s37 = sphi 0, %s39
      %s40 = sphi 0, %s37
      %s41 = sphi 0, %s40
      %s57 = sphi 0, %s41
      %s69 = sphi 0, %s71
      %s72 = sphi 0, %s69
      %s73 = sphi 0, %s72
      %s89 = sphi 0, %s73
      %s93 = sphi 0, %s93
      %s95 = sphi 0, %s93
      %s96 = sphi 0, %s95
      %s110 = sphi 0, %s96
      %s114 = sphi 0, %s114
      %s116 = sphi 0, %s114
      %s117 = sphi 0, %s116
      %s131 = sphi 0, %s117
      %s139 = sphi 0, %s141
      %s142 = sphi 0, %s139
      %s143 = sphi 0, %s142
      %s159 = sphi 0, %s143
    $region4: #{tpu_custom_call.1} parent=1 // loop_header_branch
      %16 = sbr.rel (%p14) target = $region8
    $region5: #{tpu_custom_call.1} parent=1 // loop_body
      %s18 = ssub.s32 %s13, 1
      %s19 = ssub.s32 %s13, 2
      %s26 = sadd.s32 1, %s21
      %p27 = scmp.ge.s32.totalorder %s26, 1
      %s28 = scalar_select %p27, 0, %s26
      %s29 = sadd.s32 1, %s20
      %s30 = scalar_select %p27, %s29, %s20
      %p31 = scmp.ge.s32.totalorder %s30, 2
      %s32 = scalar_select %p31, 0, %s30
      %s33 = ssub.s32 %s20, %s32
      %s34 = ssub.s32 %s21, %s28
      %s35 = sor.u32 %s33, %s34
      %p36 = scmp.eq.s32.totalorder %s35, 0
      %s38 = sadd.s32 %s37, 1
      %s39 = scalar_select %p36, %s37, %s38
      %p42 = pneg %p36
      %p43 = scmp.eq.s32.totalorder %s13, 1
      %p44 = por %p42, %p43
      %p45 = scmp.ne.s32.totalorder %s37, %s40
      %p46 = scmp.eq.s32.totalorder %s13, 0
      %p47 = por %p45, %p46
      %p48 = scmp.ne.s32.totalorder %s37, %s40
      %p49 = scmp.eq.s32.totalorder %s18, 1
      %p50 = por %p48, %p49
      %p51 = scmp.ne.s32.totalorder %s40, %s41
      %p52 = scmp.eq.s32.totalorder %s18, 0
      %p53 = por %p51, %p52
      %p54 = scmp.ne.s32.totalorder %s40, %s41
      %p55 = scmp.eq.s32.totalorder %s19, 1
      %p56 = por %p54, %p55
      %p58 = scmp.ne.s32.totalorder %s41, %s57
      %p59 = scmp.eq.s32.totalorder %s19, 0
      %p60 = por %p58, %p59
      %s61 = sadd.s32 %s21, 1
      %s62 = smul.u32 %s61, 2
      %s63 = sadd.s32 %s28, 1
      %s64 = smul.u32 %s63, 2
      %s65 = ssub.s32 %s20, %s32
      %s66 = ssub.s32 %s62, %s64
      %s67 = sor.u32 %s65, %s66
      %p68 = scmp.eq.s32.totalorder %s67, 0
      %s70 = sadd.s32 %s69, 1
      %s71 = scalar_select %p68, %s69, %s70
      %p74 = pneg %p68
      %p75 = scmp.eq.s32.totalorder %s13, 1
      %p76 = por %p74, %p75
      %p77 = scmp.ne.s32.totalorder %s69, %s72
      %p78 = scmp.eq.s32.totalorder %s13, 0
      %p79 = por %p77, %p78
      %p80 = scmp.ne.s32.totalorder %s69, %s72
      %p81 = scmp.eq.s32.totalorder %s18, 1
      %p82 = por %p80, %p81
      %p83 = scmp.ne.s32.totalorder %s72, %s73
      %p84 = scmp.eq.s32.totalorder %s18, 0
      %p85 = por %p83, %p84
      %p86 = scmp.ne.s32.totalorder %s72, %s73
      %p87 = scmp.eq.s32.totalorder %s19, 1
      %p88 = por %p86, %p87
      %p90 = scmp.ne.s32.totalorder %s73, %s89
      %p91 = scmp.eq.s32.totalorder %s19, 0
      %p92 = por %p90, %p91
      %s94 = sadd.s32 %s93, 1
      %p97 = scmp.eq.s32.totalorder %s13, 1
      %p98 = scmp.ne.s32.totalorder %s93, %s95
      %p99 = scmp.eq.s32.totalorder %s13, 0
      %p100 = por %p98, %p99
      %p101 = scmp.ne.s32.totalorder %s93, %s95
      %p102 = scmp.eq.s32.totalorder %s18, 1
      %p103 = por %p101, %p102
      %p104 = scmp.ne.s32.totalorder %s95, %s96
      %p105 = scmp.eq.s32.totalorder %s18, 0
      %p106 = por %p104, %p105
      %p107 = scmp.ne.s32.totalorder %s95, %s96
      %p108 = scmp.eq.s32.totalorder %s19, 1
      %p109 = por %p107, %p108
      %p111 = scmp.ne.s32.totalorder %s96, %s110
      %p112 = scmp.eq.s32.totalorder %s19, 0
      %p113 = por %p111, %p112
      %s115 = sadd.s32 %s114, 1
      %p118 = scmp.eq.s32.totalorder %s13, 1
      %p119 = scmp.ne.s32.totalorder %s114, %s116
      %p120 = scmp.eq.s32.totalorder %s13, 0
      %p121 = por %p119, %p120
      %p122 = scmp.ne.s32.totalorder %s114, %s116
      %p123 = scmp.eq.s32.totalorder %s18, 1
      %p124 = por %p122, %p123
      %p125 = scmp.ne.s32.totalorder %s116, %s117
      %p126 = scmp.eq.s32.totalorder %s18, 0
      %p127 = por %p125, %p126
      %p128 = scmp.ne.s32.totalorder %s116, %s117
      %p129 = scmp.eq.s32.totalorder %s19, 1
      %p130 = por %p128, %p129
      %p132 = scmp.ne.s32.totalorder %s117, %s131
      %p133 = scmp.eq.s32.totalorder %s19, 0
      %p134 = por %p132, %p133
      %s135 = ssub.s32 %s20, %s32
      %s136 = ssub.s32 %s21, %s28
      %s137 = sor.u32 %s135, %s136
      %p138 = scmp.eq.s32.totalorder %s137, 0
      %s140 = sadd.s32 %s139, 1
      %s141 = scalar_select %p138, %s139, %s140
      %p144 = pneg %p138
      %p145 = scmp.eq.s32.totalorder %s13, 1
      %p146 = por %p144, %p145
      %p147 = scmp.ne.s32.totalorder %s139, %s142
      %p148 = scmp.eq.s32.totalorder %s13, 0
      %p149 = por %p147, %p148
      %p150 = scmp.ne.s32.totalorder %s139, %s142
      %p151 = scmp.eq.s32.totalorder %s18, 1
      %p152 = por %p150, %p151
      %p153 = scmp.ne.s32.totalorder %s142, %s143
      %p154 = scmp.eq.s32.totalorder %s18, 0
      %p155 = por %p153, %p154
      %p156 = scmp.ne.s32.totalorder %s142, %s143
      %p157 = scmp.eq.s32.totalorder %s19, 1
      %p158 = por %p156, %p157
      %p160 = scmp.ne.s32.totalorder %s143, %s159
      %p161 = scmp.eq.s32.totalorder %s19, 0
      %p162 = por %p160, %p161
      %p163 = scmp.le.s32.totalorder 1, %s13
      %p164 = scmp.lt.s32.totalorder %s13, 3
      %p165 = pnand %p163, %p164
      %p166 = pneg %p165
      // Predicated region
      $region9: #{tpu_custom_call.1} parent=5 // pred_check
        _
      $region10: #{tpu_custom_call.1} parent=5 // pred_check_branch
        %168 = sbr.rel (%p165) target = $region12
      $region11: #{tpu_custom_call.1} parent=5 // pred_region
        %s169 = ssub.s32 %s13, 1
        // Predicated region
        $region13: #{tpu_custom_call.1} parent=11 // pred_check
          %p170 = pneg %p106
        $region14: #{tpu_custom_call.1} parent=11 // pred_check_branch
          %172 = sbr.rel (%p170) target = $region16
        $region15: #{tpu_custom_call.1} parent=11 // pred_region
          _
        $region16: #{tpu_custom_call.1} parent=11 // pred_fallthru
          _
        // Predicated region
        $region17: #{tpu_custom_call.1} parent=11 // pred_check
          %p173 = pneg %p127
        $region18: #{tpu_custom_call.1} parent=11 // pred_check_branch
          %175 = sbr.rel (%p173) target = $region20
        $region19: #{tpu_custom_call.1} parent=11 // pred_region
          _
        $region20: #{tpu_custom_call.1} parent=11 // pred_fallthru
          _
      $region12: #{tpu_custom_call.1} parent=5 // pred_fallthru
        _
      %p176 = scmp.lt.s32.totalorder %s13, 2
      // Predicated region
      $region21: #{tpu_custom_call.1} parent=5 // pred_check
        %p177 = pneg %p176
      $region22: #{tpu_custom_call.1} parent=5 // pred_check_branch
        %179 = sbr.rel (%p177) target = $region24
      $region23: #{tpu_custom_call.1} parent=5 // pred_region
        // Predicated region
        $region25: #{tpu_custom_call.1} parent=23 // pred_check
          %p180 = pneg %p47
        $region26: #{tpu_custom_call.1} parent=23 // pred_check_branch
          %182 = sbr.rel (%p180) target = $region28
        $region27: #{tpu_custom_call.1} parent=23 // pred_region
          %s183 = smul.u32 2, %s21
          %s184 = ssub.s32 3, %s183
          %p185 = scmp.lt.s32.totalorder %s184, 2
          %s186 = scalar_select %p185, %s184, 2
          %s187 = smul.u32 128, %s186
          %p188 = scmp.lt.s32.totalorder %s20, 1
          %s189 = scalar_select %p188, %s20, 1
          %p190 = scmp.lt.s32.totalorder %s183, 2
          %s191 = scalar_select %p190, %s183, 2
          %s192 = smul.addr %s189, 3
          %s193 = sadd.s32 %s191, %s192
          %s194 = smul.addr %s193, 8
          %s195 = scalar_lea.vmem %s0, %s194
          %s196 = smul.u32 2, %s21
          %s197 = ssub.s32 3, %s196
          %p198 = scmp.lt.s32.totalorder %s197, 2
          %s199 = scalar_select %p198, %s197, 2
          %s200 = smul.u32 128, %s199
        $region28: #{tpu_custom_call.1} parent=23 // pred_fallthru
          _
        // Predicated region
        $region29: #{tpu_custom_call.1} parent=23 // pred_check
          %p201 = pneg %p79
        $region30: #{tpu_custom_call.1} parent=23 // pred_check_branch
          %203 = sbr.rel (%p201) target = $region32
        $region31: #{tpu_custom_call.1} parent=23 // pred_region
          %s204 = sadd.s32 %s21, 1
          %s205 = smul.u32 %s204, 2
          %p206 = scmp.lt.s32.totalorder %s20, 1
          %s207 = scalar_select %p206, %s20, 1
          %p208 = scmp.lt.s32.totalorder %s205, 2
          %s209 = scalar_select %p208, %s205, 2
          %s210 = smul.addr %s207, 3
          %s211 = sadd.s32 %s209, %s210
          %s212 = smul.addr %s211, 8
          %s213 = scalar_lea.vmem %s1, %s212
          %s214 = sadd.s32 %s21, 1
          %s215 = smul.u32 %s214, 2
        $region32: #{tpu_custom_call.1} parent=23 // pred_fallthru
          _
      $region24: #{tpu_custom_call.1} parent=5 // pred_fallthru
        _
      %p216 = scmp.le.s32.totalorder 1, %s13
      %p217 = scmp.lt.s32.totalorder %s13, 3
      %p218 = pnand %p216, %p217
      %p219 = pneg %p218
      // Predicated region
      $region33: #{tpu_custom_call.1} parent=5 // pred_check
        _
      $region34: #{tpu_custom_call.1} parent=5 // pred_check_branch
        %221 = sbr.rel (%p218) target = $region36
      $region35: #{tpu_custom_call.1} parent=5 // pred_region
        %s222 = ssub.s32 %s13, 1
        %s223 = smul.u32 2, %s23
        %s224 = ssub.s32 3, %s223
        %p225 = scmp.lt.s32.totalorder %s224, 2
        %s226 = scalar_select %p225, %s224, 2
        %s227 = smul.u32 128, %s226
        %p228 = scmp.lt.s32.totalorder %s22, 1
        %s229 = scalar_select %p228, %s22, 1
        %p230 = scmp.lt.s32.totalorder %s223, 2
        %s231 = scalar_select %p230, %s223, 2
        %s232 = smul.addr %s229, 3
        %s233 = sadd.s32 %s231, %s232
        %s234 = smul.addr %s233, 8
        %s235 = scalar_lea.vmem %s0, %s234
        %p236 = pneg %p53
        %p237 = pneg %p50
        %s238 = sadd.s32 %s23, 1
        %s239 = smul.u32 %s238, 2
        %p240 = scmp.lt.s32.totalorder %s22, 1
        %s241 = scalar_select %p240, %s22, 1
        %p242 = scmp.lt.s32.totalorder %s239, 2
        %s243 = scalar_select %p242, %s239, 2
        %s244 = smul.addr %s241, 3
        %s245 = sadd.s32 %s243, %s244
        %s246 = smul.addr %s245, 8
        %s247 = scalar_lea.vmem %s1, %s246
        %p248 = pneg %p85
        %p249 = pneg %p82
        %p250 = pneg %p106
        %p251 = pneg %p103
        %p252 = pneg %p127
        %p253 = pneg %p124
        %p254 = pneg %p155
        %p255 = pneg %p152
        %s256 = sand.u32 %s142, 1
        %s257 = scalar_lea.sflag [#allocation4], %s256
        %s258 = sand.u32 %s142, 1
        %s259 = smul.addr %s258, 16
        %s260 = scalar_lea.vmem [#allocation3], %s259
        %s261 = smul.u32 2, %s23
        %s262 = ssub.s32 3, %s261
        %p263 = scmp.lt.s32.totalorder %s262, 2
        %s264 = scalar_select %p263, %s262, 2
        %s265 = smul.u32 128, %s264
        %p266 = scmp.lt.s32.totalorder %s22, 1
        %s267 = scalar_select %p266, %s22, 1
        %p268 = scmp.lt.s32.totalorder %s261, 2
        %s269 = scalar_select %p268, %s261, 2
        %s270 = smul.addr %s267, 3
        %s271 = sadd.s32 %s269, %s270
        %s272 = smul.addr %s271, 8
        %s273 = scalar_lea.vmem %s0, %s272
        %s274 = smul.u32 2, %s23
        %s275 = ssub.s32 3, %s274
        %p276 = scmp.lt.s32.totalorder %s275, 2
        %s277 = scalar_select %p276, %s275, 2
        %s278 = smul.u32 128, %s277
        %s279 = sadd.s32 %s23, 1
        %s280 = smul.u32 %s279, 2
        %p281 = scmp.lt.s32.totalorder %s22, 1
        %s282 = scalar_select %p281, %s22, 1
        %p283 = scmp.lt.s32.totalorder %s280, 2
        %s284 = scalar_select %p283, %s280, 2
        %s285 = smul.addr %s282, 3
        %s286 = sadd.s32 %s284, %s285
        %s287 = smul.addr %s286, 8
        %s288 = scalar_lea.vmem %s1, %s287
        %s289 = sadd.s32 %s23, 1
        %s290 = smul.u32 %s289, 2
        %s291 = smul.u32 2, %s23
        %v292 = vld [vmem:[%s273] sm:$0xff]
        %v293 = vld [vmem:[%s273 + $0x8] sm:$0xff]
        %vm294 = vcmask 261120
        %295 = vst.msk [vmem:[#allocation2] sm:$0xff] %vm294, %v292
        %296 = vst.msk [vmem:[#allocation2 + $0x8] sm:$0xff] %vm294, %v293
        %v297 = vld [vmem:[%s288] sm:$0xff]
        %298 = vst.msk [vmem:[#allocation2 + $0x10] sm:$0xff] %vm294, %v297
        %v299 = vld [vmem:[#allocation2] sm:$0xff]
        %v300 = vld [vmem:[#allocation2 + $0x8] sm:$0xff]
        %v301 = vld [vmem:[#allocation2 + $0x10] sm:$0xff]
        %v302 = vrot.slane %v299, 1
        %v303 = vrot.slane %v300, 1
        %v304 = vrot.slane %v301, 1
        %v305 = vlaneseq
        %v306 = vshrl.u32 %v305, 7
        %vm307 = vcmp.lt.s32.totalorder %v306, 7
        %v308 = vsel %vm307, %v303, %v304
        %v309 = vsel %vm307, %v302, %v303
        %v310 = vrot.slane %v299, 2
        %v311 = vrot.slane %v300, 2
        %v312 = vrot.slane %v301, 2
        %vm313 = vcmp.lt.s32.totalorder %v306, 6
        %v314 = vsel %vm313, %v311, %v312
        %v315 = vsel %vm313, %v310, %v311
        %318 = vrot.lane.b32.xlu0 %v309, 32
        %v319 = vpop.permute.xlu0 %318
        %320 = vrot.lane.b32.xlu0 %v308, 32
        %v321 = vpop.permute.xlu0 %320
        %326 = vrot.lane.b32.xlu0 %v315, 64
        %v327 = vpop.permute.xlu0 %326
        %328 = vrot.lane.b32.xlu0 %v314, 64
        %v329 = vpop.permute.xlu0 %328
        %v332 = vsel %vm294, %v299, %v319
        %v333 = vsel %vm294, %v300, %v321
        %vm334 = vcmask 523264
        %v335 = vsel %vm334, %v332, %v327
        %v336 = vsel %vm334, %v333, %v329
        %v337 = vld [vmem:[%s2] sm:$0xff]
        %v338 = vld [vmem:[%s2 + $0x8] sm:$0xff]
        %v339 = vld [vmem:[%s2 + $0x10] sm:$0xff]
        %v340 = vld [vmem:[%s2 + $0x18] sm:$0xff]
        %v341 = vld [vmem:[%s2 + $0x20] sm:$0xff]
        %v342 = vld [vmem:[%s2 + $0x28] sm:$0xff]
        %v343 = vld [vmem:[%s2 + $0x30] sm:$0xff]
        %v344 = vld [vmem:[%s2 + $0x38] sm:$0xff]
        %v345 = vld [vmem:[%s2 + $0x40] sm:$0xff]
        %v346 = vld [vmem:[%s2 + $0x48] sm:$0xff]
        %v347 = vld [vmem:[%s2 + $0x50] sm:$0xff]
        %v348 = vld [vmem:[%s2 + $0x58] sm:$0xff]
        %v349 = vld [vmem:[%s3] sm:$0x1]
        %v351 = vlaneseq
        %v352 = vshrl.u32 %v351, 7
        %v353 = vsub.s32 0, %v352
        %v354 = vrot.slane %v349, %v353
        %vm356 = vcmask 785408
        %v358 = vsel %vm356, %v335, 0
        %v361 = vsel %vm356, %v336, 0
        %363 = vmatprep.subr.mxu0 0.0
        %364 = vmatpush1.msra.mxu0 %v337
        %365 = vmatprep.subr.mxu0 0.0
        %366 = vmatpush1.msra.mxu0 %v338
        %367 = vmatprep.subr.mxu0 0.0
        %368 = vmatpush1.msra.mxu0 %v339
        %369 = vmatprep.subr.mxu0 0.0
        %370 = vmatpush1.msra.mxu0 %v340
        %371 = vmatprep.subr.mxu0 0.0
        %372 = vmatpush1.msra.mxu0 %v341
        %373 = vmatprep.subr.mxu0 0.0
        %374 = vmatpush1.msra.mxu0 %v342
        %375 = vmatprep.subr.mxu0 0.0
        %376 = vmatpush1.msra.mxu0 %v343
        %377 = vmatprep.subr.mxu0 0.0
        %378 = vmatpush1.msra.mxu0 %v344
        %379 = vmatprep.subr.mxu0 0.0
        %380 = vmatpush1.msra.mxu0 %v345
        %381 = vmatprep.subr.mxu0 0.0
        %382 = vmatpush1.msra.mxu0 %v346
        %383 = vmatprep.subr.mxu0 0.0
        %384 = vmatpush1.msra.mxu0 %v347
        %385 = vmatprep.subr.mxu0 0.0
        %386 = vmatpush1.msra.mxu0 %v348
        %387 = vmatprep.subr.mxu0 0.0
        %388 = vmatpush1.msra.mxu0 0.0
        %389 = vmatprep.subr.mxu0 0.0
        %390 = vmatpush1.msra.mxu0 0.0
        %391 = vmatprep.subr.mxu0 0.0
        %392 = vmatpush1.msra.mxu0 0.0
        %393 = vmatprep.subr.mxu0 0.0
        %394 = vmatpush1.msra.mxu0 0.0
        %395 = vmatprep.subr.mxu0 0.0
        %396 = vmatpush1.msra.mxu0 0.0
        %397 = vmatprep.subr.mxu0 0.0
        %398 = vmatpush1.msra.mxu0 0.0
        %399 = vmatprep.subr.mxu0 0.0
        %400 = vmatpush1.msra.mxu0 0.0
        %401 = vmatprep.subr.mxu0 0.0
        %402 = vmatpush1.msra.mxu0 0.0
        %403 = vmatprep.subr.mxu0 0.0
        %404 = vmatpush1.msra.mxu0 0.0
        %405 = vmatprep.subr.mxu0 0.0
        %406 = vmatpush1.msra.mxu0 0.0
        %407 = vmatprep.subr.mxu0 0.0
        %408 = vmatpush1.msra.mxu0 0.0
        %409 = vmatprep.subr.mxu0 0.0
        %410 = vmatpush1.msra.mxu0 0.0
        %411 = vmatprep.subr.mxu0 0.0
        %412 = vmatpush1.msra.mxu0 0.0
        %413 = vmatprep.subr.mxu0 0.0
        %414 = vmatpush1.msra.mxu0 0.0
        %415 = vmatprep.subr.mxu0 0.0
        %416 = vmatpush1.msra.mxu0 0.0
        %417 = vmatprep.subr.mxu0 0.0
        %418 = vmatpush1.msra.mxu0 0.0
        %419 = vmatprep.subr.mxu0 0.0
        %420 = vmatpush1.msra.mxu0 0.0
        %421 = vmatprep.subr.mxu0 0.0
        %422 = vmatpush1.msra.mxu0 0.0
        %423 = vmatprep.subr.mxu0 0.0
        %424 = vmatpush1.msra.mxu0 0.0
        %425 = vmatprep.subr.mxu0 0.0
        %426 = vmatpush1.msra.mxu0 0.0
        %427 = vmatprep.mubr.f32.mxu0 0.0
        %428 = vmatmul.mubr.f32.gmra.mrb[0].mxu0 %v358
        %v429 = vpop.f32.mrb[0].mxu0
        %v430 = vadd.f32 %v354, %v429
        %v431 = vpop.f32.mrb[0].mxu0
        %432 = vmatprep.mubr.f32.mxu0 0.0
        %433 = vmatmul.mubr.f32.gmra.mrb[0].mxu0 %v361
        %v434 = vpop.f32.mrb[0].mxu0
        %v435 = vadd.f32 %v354, %v434
        %v436 = vpop.f32.mrb[0].mxu0
        %437 = vdwg.mxu0
        %438 = vst.msk [vmem:[%s260] sm:$0xff] %vm294, %v430
        %439 = vst.msk [vmem:[%s260 + $0x8] sm:$0xff] %vm294, %v435
        %s440 = sand.u32 %s142, 1
        %s441 = scalar_lea.sflag [#allocation4], %s440
        %s442 = sand.u32 %s142, 1
        %s443 = smul.addr %s442, 16
        %s444 = scalar_lea.vmem [#allocation3], %s443
        // Predicated region
        $region37: #{tpu_custom_call.1} parent=35 // pred_check
          %p445 = pneg %p152
        $region38: #{tpu_custom_call.1} parent=35 // pred_check_branch
          %447 = sbr.rel (%p445) target = $region40
        $region39: #{tpu_custom_call.1} parent=35 // pred_region
          %s448 = smul.u32 2, %s23
          %s450 = ssub.s32 256, 256
          %451 = vsyncadd %s441, %s450
          %s452 = smul.addr %s22, 2
          %s453 = sadd.s32 %s448, %s452
          %s454 = smul.addr %s453, 128
          %s455 = scalar_lea.hbm %s4, %s454
          %s456 = sshll.u32 %s444, 4
          %s457 = int_to_ptr.vmem [resolvable:$true] %s456
          %462 = dma.vmem_to_hbm [thread:$0]  %s457, 256, %s455, %s441, 128, 128, 8
        $region40: #{tpu_custom_call.1} parent=35 // pred_fallthru
          _
      $region36: #{tpu_custom_call.1} parent=5 // pred_fallthru
        _
      %p463 = scmp.le.s32.totalorder 2, %s13
      // Predicated region
      $region41: #{tpu_custom_call.1} parent=5 // pred_check
        %p464 = pneg %p463
      $region42: #{tpu_custom_call.1} parent=5 // pred_check_branch
        %466 = sbr.rel (%p464) target = $region44
      $region43: #{tpu_custom_call.1} parent=5 // pred_region
        %s467 = ssub.s32 %s13, 2
        // Predicated region
        $region45: #{tpu_custom_call.1} parent=43 // pred_check
          %p468 = pneg %p158
        $region46: #{tpu_custom_call.1} parent=43 // pred_check_branch
          %470 = sbr.rel (%p468) target = $region48
        $region47: #{tpu_custom_call.1} parent=43 // pred_region
          %s471 = sand.u32 %s143, 1
          %s472 = scalar_lea.sflag [#allocation4], %s471
          %s473 = sand.u32 %s143, 1
          %s474 = smul.addr %s473, 16
          %s475 = scalar_lea.vmem [#allocation3], %s474
          %476 = dma.done %s472, 256
        $region48: #{tpu_custom_call.1} parent=43 // pred_fallthru
          _
      $region44: #{tpu_custom_call.1} parent=5 // pred_fallthru
        _
    $region6: #{tpu_custom_call.1} parent=1 // loop_footer
      %s17 = sadd.s32 1, %s13
    $region7: #{tpu_custom_call.1} parent=1 // loop_footer_branch
      %12 = sbr.rel target = $region3
    $region8: #{tpu_custom_call.1} parent=1 // loop_exit
      _
    %477 = vsyncpa [#allocation4], 1
    %s478 = scalar_lea.sflag [#allocation4], 1
    %479 = vsyncpa %s478, 1

</llo_original>
